<compile_context>
chip_gen: v7x
topology: tpu7x:2x2x1
jax: 0.10.0
libtpu: 0.0.40
codegen_flags: <defaults>
</compile_context>

<pallas_src>
import jax
import jax.numpy as jnp
from jax.experimental import pallas as pl
from jax.experimental.pallas import tpu as pltpu


# ----------------------------------------------------------------------------
# Pass 1: streaming global average / max pooling over the (C, H*W) planes.
# ----------------------------------------------------------------------------
def _make_pool_kernel(hw, thw, needs_mask):
    """Kernel with static spatial size / tile size / mask flag."""

    def kernel(x_ref, sum_ref, max_ref):
        s = pl.program_id(2)
        ns = pl.num_programs(2)

        @pl.when(s == 0)
        def _init():
            sum_ref[...] = jnp.zeros_like(sum_ref)
            max_ref[...] = jnp.full_like(max_ref, -jnp.inf)

        def accumulate(x_sum, x_max):
            # Partial spatial (lane-axis) reductions, accumulated in f32
            # directly in the resident output blocks.
            sum_ref[...] += jnp.sum(x_sum, axis=-1, dtype=jnp.float32)[:, None, :]
            max_ref[...] = jnp.maximum(
                max_ref[...],
                jnp.max(x_max, axis=-1).astype(jnp.float32)[:, None, :])

        if needs_mask:
            # Only the final (partial) spatial tile pays for iota + selects.
            @pl.when(s == ns - 1)
            def _last_tile():
                x = x_ref[...]
                lane = jax.lax.broadcasted_iota(jnp.int32, x.shape, 2)
                valid = (s * thw + lane) < hw
                accumulate(jnp.where(valid, x, jnp.zeros_like(x)),
                           jnp.where(valid, x, jnp.full_like(x, -jnp.inf)))

            @pl.when(s < ns - 1)
            def _interior_tile():
                x = x_ref[...]
                accumulate(x, x)
        else:
            x = x_ref[...]
            accumulate(x, x)

    return kernel


# ----------------------------------------------------------------------------
# Pass 2: tiny shared-MLP + sigmoid epilogue.
# ----------------------------------------------------------------------------
def _make_mlp_kernel(hw):
    inv_hw = 1.0 / float(hw)

    def kernel(sum_ref, max_ref, w1t_ref, w2t_ref, o_ref):
        avg = sum_ref[...][:, 0, :] * inv_hw        # (bb2, C) f32
        mx = max_ref[...][:, 0, :]                  # (bb2, C) f32

        w1t = w1t_ref[...]                          # (C, hidden), native dtype
        w2t = w2t_ref[...]                          # (hidden, C), native dtype
        wdt = w1t.dtype

        def mlp(v):
            h = jnp.maximum(
                jnp.dot(v.astype(wdt), w1t, preferred_element_type=jnp.float32),
                0.0)
            return jnp.dot(h.astype(wdt), w2t, preferred_element_type=jnp.float32)

        y = mlp(avg) + mlp(mx)                      # (bb2, C) f32
        o_ref[...] = jax.nn.sigmoid(y)[:, None, :].astype(o_ref.dtype)

    return kernel


# ----------------------------------------------------------------------------
# Tiling / VMEM policy.
# ----------------------------------------------------------------------------
def _vmem_capacity_bytes():
    try:
        return int(pltpu.get_tpu_info().vmem_capacity_bytes)
    except Exception:
        return 64 << 20   # conservative (v7x per-TensorCore) fallback


def _pick_tiles(B, C, HW, itemsize, vmem_cap):
    """Choose (batch_block, channel_block, spatial_tile) for the pooling pass.

    channel blocks are either full C or a multiple of 128 (keeps the pooled
    output BlockSpec lane-aligned); spatial tiles are full HW or a multiple
    of 128 lanes.
    """
    if vmem_cap >= (96 << 20):          # v5e / v6e: 128 MiB physical VMEM
        TARGET, CAP = 8 << 20, 24 << 20
    else:                               # v7x: 64 MiB per TensorCore
        TARGET, CAP = 4 << 20, 8 << 20

    row = HW * itemsize                 # one contiguous (b, c, :) row in HBM
    plane = C * row                     # one batch element's (C, H*W) plane

    bb, cb, thw = 1, C, HW
    if plane <= CAP:
        # Whole plane(s) per block; grow along batch toward TARGET but keep
        # >= 2 parallel grid steps when B >= 2 so both v7x cores get work.
        bb = max(1, min(B, TARGET // max(plane, 1)))
        if B >= 2:
            bb = min(bb, -(-B // 2))
    elif C > 128 and 128 * row <= CAP:
        # Plane too big: block channels in 128-multiples (each block stays one
        # contiguous HBM region, and the block size is explicitly <= CAP).
        cb = min(C, (CAP // row) // 128 * 128)
    else:
        # Even a 128-channel slab at full H*W is too big (or C <= 128):
        # tile the spatial axis in 128-lane multiples under the cap.
        cb = C if C <= 128 else 128
        lanes = CAP // max(cb * itemsize, 1)
        thw = max(128, (lanes // 128) * 128)
        if thw >= HW:
            thw = HW

    # B == 1 (typical inference): split channels so the second v7x TensorCore
    # has work during the HBM-bound pooling stream (cheap on single-TC chips).
    if B == 1 and cb == C and C >= 256 and thw == HW:
        cb = -(-C // 256) * 128         # multiple of 128, => >= 2 channel blocks

    return int(bb), int(cb), int(thw)


# ----------------------------------------------------------------------------
# Public wrapper.
# ----------------------------------------------------------------------------
def channel_attention(x, w1, w2):
    """x: (B, C, H, W) NCHW.  w1: (C//16, C) = fc1.weight[:, :, 0, 0].
    w2: (C, C//16) = fc2.weight[:, :, 0, 0].  Returns (B, C, 1, 1)."""
    B, C, H, W = x.shape
    hidden = w1.shape[0]
    assert w1.shape == (hidden, C) and w2.shape == (C, hidden)
    HW = H * W
    itemsize = jnp.dtype(x.dtype).itemsize
    vmem_cap = _vmem_capacity_bytes()

    bb, cb, thw = _pick_tiles(B, C, HW, itemsize, vmem_cap)
    nb = -(-B // bb)
    nc = -(-C // cb)
    ns = -(-HW // thw)
    needs_mask = (HW % thw) != 0

    x_flat = x.reshape(B, C, HW)

    # ---- pass 1: streaming avg/max pooling -----------------------------------
    x_block = bb * cb * thw * itemsize
    pool_block = bb * cb * 4
    need1 = 2 * x_block + 4 * pool_block + (2 << 20)
    vmem_limit1 = int(min(max(need1, 16 << 20), (vmem_cap * 3) // 4))

    pool_kernel = _make_pool_kernel(HW, thw, needs_mask)
    sums, maxes = pl.pallas_call(
        pool_kernel,
        out_shape=(jax.ShapeDtypeStruct((B, 1, C), jnp.float32),
                   jax.ShapeDtypeStruct((B, 1, C), jnp.float32)),
        grid_spec=pltpu.PrefetchScalarGridSpec(
            num_scalar_prefetch=0,
            grid=(nb, nc, ns),
            in_specs=[
                pl.BlockSpec((bb, cb, thw), lambda b, c, s: (b, c, s)),
            ],
            out_specs=[
                pl.BlockSpec((bb, 1, cb), lambda b, c, s: (b, 0, c)),
                pl.BlockSpec((bb, 1, cb), lambda b, c, s: (b, 0, c)),
            ],
        ),
        compiler_params=pltpu.CompilerParams(
            dimension_semantics=("parallel", "parallel", "arbitrary"),
            vmem_limit_bytes=vmem_limit1,
        ),
    )(x_flat)

    # ---- pass 2: shared MLP + sigmoid epilogue --------------------------------
    w1t = jnp.transpose(w1)             # (C, hidden)
    w2t = jnp.transpose(w2)             # (hidden, C)
    w_item = jnp.dtype(w1.dtype).itemsize

    bb2 = max(1, min(B, (4 << 20) // max(C * 4, 1)))
    nb2 = -(-B // bb2)
    need2 = (4 * bb2 * C * 4                    # pooled input blocks (x2 buf)
             + 4 * C * hidden * w_item          # w1t / w2t (x2 buf)
             + 2 * bb2 * C * itemsize           # output block (x2 buf)
             + (2 << 20))
    vmem_limit2 = int(min(max(need2, 16 << 20), (vmem_cap * 3) // 4))

    mlp_kernel = _make_mlp_kernel(HW)
    out = pl.pallas_call(
        mlp_kernel,
        out_shape=jax.ShapeDtypeStruct((B, 1, C), x.dtype),
        grid_spec=pltpu.PrefetchScalarGridSpec(
            num_scalar_prefetch=0,
            grid=(nb2,),
            in_specs=[
                pl.BlockSpec((bb2, 1, C), lambda b: (b, 0, 0)),
                pl.BlockSpec((bb2, 1, C), lambda b: (b, 0, 0)),
                pl.BlockSpec((C, hidden), lambda b: (0, 0)),
                pl.BlockSpec((hidden, C), lambda b: (0, 0)),
            ],
            out_specs=pl.BlockSpec((bb2, 1, C), lambda b: (b, 0, 0)),
        ),
        compiler_params=pltpu.CompilerParams(
            dimension_semantics=("parallel",),
            vmem_limit_bytes=vmem_limit2,
        ),
    )(sums, maxes, w1t, w2t)

    return out.reshape(B, C, 1, 1)


# ----------------------------------------------------------------------------
# Pure-JAX reference mirroring the PyTorch forward exactly.
# ----------------------------------------------------------------------------
def _reference(x, w1, w2):
    avg = jnp.mean(x, axis=(2, 3))                        # (B, C)
    mx = jnp.max(x, axis=(2, 3))                          # (B, C)

    def mlp(v):
        h = jnp.maximum(v @ w1.T, 0.0)                    # (B, C//16)
        return h @ w2.T                                   # (B, C)

    out = jax.nn.sigmoid(mlp(avg) + mlp(mx))
    return out[:, :, None, None]


if __name__ == "__main__":
    B, C, H, W = 2, 32, 16, 16          # C must be >= 16 (module hardcodes //16)
    hidden = C // 16

    key = jax.random.PRNGKey(0)
    kx, k1, k2 = jax.random.split(key, 3)
    x = jax.random.normal(kx, (B, C, H, W), dtype=jnp.float32)
    # Deterministic synthetic weights (shapes match nn.Conv2d(C, C//16, 1) etc.).
    w1 = jax.random.normal(k1, (hidden, C), dtype=jnp.float32) * (1.0 / jnp.sqrt(C))
    w2 = jax.random.normal(k2, (C, hidden), dtype=jnp.float32) * (1.0 / jnp.sqrt(hidden))

    out = channel_attention(x, w1, w2)
    out = jax.block_until_ready(out)

    ref = _reference(x, w1, w2)
    assert out.shape == (B, C, 1, 1)
    assert jnp.allclose(out, ref, atol=1e-5, rtol=1e-5)

    print("KERNEL_OK")
</pallas_src>

<mosaic_0001>
module attributes {stable_mosaic.version = 11 : i64} {
  func.func @kernel(%arg0: i32, %arg1: i32, %arg2: i32, %arg3: memref<1x32x256xf32, #tpu.memory_space<vmem>>, %arg4: memref<1x1x32xf32, #tpu.memory_space<vmem>>, %arg5: memref<1x1x32xf32, #tpu.memory_space<vmem>>) attributes {dimension_semantics = [#tpu.dimension_semantics<parallel>, #tpu.dimension_semantics<parallel>, #tpu.dimension_semantics<arbitrary>], iteration_bounds = array<i64: 2, 1, 1>, scalar_prefetch = 0 : i64, scratch_operands = 0 : i64, tpu.core_type = #tpu.core_type<tc>, window_params = [{transform_indices = @transform_0, window_bounds = array<i64: 1, 32, 256>}, {transform_indices = @transform_1, window_bounds = array<i64: 1, 1, 32>}, {transform_indices = @transform_2, window_bounds = array<i64: 1, 1, 32>}]} {
    %c0_i32 = arith.constant 0 : i32
    %0 = arith.cmpi eq, %arg2, %c0_i32 : i32
    %1 = arith.extui %0 : i1 to i32
    %c0_i32_0 = arith.constant 0 : i32
    %2 = arith.cmpi ne, %1, %c0_i32_0 : i32
    scf.if %2 {
      %cst_16 = arith.constant 0.000000e+00 : f32
      %14 = vector.broadcast %cst_16 : f32 to vector<1x1x32xf32>
      %c0_17 = arith.constant 0 : index
      %c0_18 = arith.constant 0 : index
      %c0_19 = arith.constant 0 : index
      %15 = vector.load %arg4[%c0_17, %c0_18, %c0_19] : memref<1x1x32xf32, #tpu.memory_space<vmem>>, vector<1x1x32xf32>
      tpu.vector_store %arg4[%c0_17, %c0_18, %c0_19], %14 {strides = array<i32>} : memref<1x1x32xf32, #tpu.memory_space<vmem>>, vector<1x1x32xf32>,
      %cst_20 = arith.constant 0xFF800000 : f32
      %16 = vector.broadcast %cst_20 : f32 to vector<1x1x32xf32>
      %c0_21 = arith.constant 0 : index
      %c0_22 = arith.constant 0 : index
      %c0_23 = arith.constant 0 : index
      %17 = vector.load %arg5[%c0_21, %c0_22, %c0_23] : memref<1x1x32xf32, #tpu.memory_space<vmem>>, vector<1x1x32xf32>
      tpu.vector_store %arg5[%c0_21, %c0_22, %c0_23], %16 {strides = array<i32>} : memref<1x1x32xf32, #tpu.memory_space<vmem>>, vector<1x1x32xf32>,
    } else {
    }
    %c0 = arith.constant 0 : index
    %c0_1 = arith.constant 0 : index
    %c0_2 = arith.constant 0 : index
    %3 = vector.load %arg3[%c0, %c0_1, %c0_2] : memref<1x32x256xf32, #tpu.memory_space<vmem>>, vector<1x32x256xf32>
    %c0_3 = arith.constant 0 : index
    %c0_4 = arith.constant 0 : index
    %c0_5 = arith.constant 0 : index
    %4 = vector.load %arg4[%c0_3, %c0_4, %c0_5] : memref<1x1x32xf32, #tpu.memory_space<vmem>>, vector<1x1x32xf32>
    %cst = arith.constant dense<0.000000e+00> : vector<1x32xf32>
    %5 = vector.multi_reduction <add>, %3, %cst [2] : vector<1x32x256xf32> to vector<1x32xf32>
    %6 = vector.shape_cast %5 : vector<1x32xf32> to vector<1x1x32xf32>
    %7 = arith.addf %4, %6 : vector<1x1x32xf32>
    %c0_6 = arith.constant 0 : index
    %c0_7 = arith.constant 0 : index
    %c0_8 = arith.constant 0 : index
    %8 = vector.load %arg4[%c0_6, %c0_7, %c0_8] : memref<1x1x32xf32, #tpu.memory_space<vmem>>, vector<1x1x32xf32>
    tpu.vector_store %arg4[%c0_6, %c0_7, %c0_8], %7 {strides = array<i32>} : memref<1x1x32xf32, #tpu.memory_space<vmem>>, vector<1x1x32xf32>,
    %c0_9 = arith.constant 0 : index
    %c0_10 = arith.constant 0 : index
    %c0_11 = arith.constant 0 : index
    %9 = vector.load %arg5[%c0_9, %c0_10, %c0_11] : memref<1x1x32xf32, #tpu.memory_space<vmem>>, vector<1x1x32xf32>
    %cst_12 = arith.constant dense<0xFF800000> : vector<1x32xf32>
    %10 = vector.multi_reduction <maximumf>, %3, %cst_12 [2] : vector<1x32x256xf32> to vector<1x32xf32>
    %11 = vector.shape_cast %10 : vector<1x32xf32> to vector<1x1x32xf32>
    %12 = arith.maximumf %9, %11 : vector<1x1x32xf32>
    %c0_13 = arith.constant 0 : index
    %c0_14 = arith.constant 0 : index
    %c0_15 = arith.constant 0 : index
    %13 = vector.load %arg5[%c0_13, %c0_14, %c0_15] : memref<1x1x32xf32, #tpu.memory_space<vmem>>, vector<1x1x32xf32>
    tpu.vector_store %arg5[%c0_13, %c0_14, %c0_15], %12 {strides = array<i32>} : memref<1x1x32xf32, #tpu.memory_space<vmem>>, vector<1x1x32xf32>,
    return
  }
  func.func @transform_0(%arg0: i32, %arg1: i32, %arg2: i32) -> (i32, i32, i32) {
    %c0_i32 = arith.constant 0 : i32
    return %arg0, %arg1, %arg2 : i32, i32, i32
  }
  func.func @transform_1(%arg0: i32, %arg1: i32, %arg2: i32) -> (i32, i32, i32) {
    %c0_i32 = arith.constant 0 : i32
    %c0_i32_0 = arith.constant 0 : i32
    return %arg0, %c0_i32, %arg1 : i32, i32, i32
  }
  func.func @transform_2(%arg0: i32, %arg1: i32, %arg2: i32) -> (i32, i32, i32) {
    %c0_i32 = arith.constant 0 : i32
    %c0_i32_0 = arith.constant 0 : i32
    return %arg0, %c0_i32, %arg1 : i32, i32, i32
  }
}

</mosaic_0001>

<llo_original>
// kernel: tpu_custom_call.1
$region0: #{tpu_custom_call.1}
  #allocation0 [shape = 'u32[]', space=smem, size = 0x4, offset = 0x4, fixed_abs, tag = 'smem constant byte address 0x4 - core index']
  #allocation1 [shape = 'u32[144,128]{1,0:T(1,128)}', space=vmem, size = 0x12000, scoped, tag = 'internal scratch']
  %s0 = inlined_call_operand.hbm [shape: f32[2,32,256], index: 0, kind: input, shape index: {}]
  %s1 = inlined_call_operand.hbm [shape: f32[2,1,32], index: 1, kind: output, shape index: {0}]
  %s2 = inlined_call_operand.hbm [shape: f32[2,1,32], index: 2, kind: output, shape index: {1}]
  %3 = xla_tuple %s1, %s2
  %s4 = sld [smem:[#allocation0]]
  $region53: #{tpu_custom_call.1} parent=0
    _
  %s6 = ssub.s32 1, %s4
  %s7 = scalar_select 0, %s6, %s4
  $region1: #{tpu_custom_call.1} parent=0
    #allocation2 [shape = 'u8[65536]{0}', space=vmem, size = 0x10000, scoped, tag = 'input window, operand 0']
    #allocation3 [shape = 's32[2]{0}', space=sflag, size = 0x8, scoped, tag = 'scoped memory for tpu_custom_call.1']
    #allocation4 [shape = 's32[2]{0}', space=sflag, size = 0x8, scoped, tag = 'scoped memory for tpu_custom_call.1']
    #allocation5 [shape = 'u8[1024]{0}', space=vmem, size = 0x400, scoped, tag = 'output window, operand 0']
    #allocation6 [shape = 'u8[1024]{0}', space=vmem, size = 0x400, scoped, tag = 'output window, operand 1']
    #allocation7 [shape = 's32[2]{0}', space=sflag, size = 0x8, scoped, tag = 'scoped memory for tpu_custom_call.1']
    %8 = vsyncpa [#allocation3], 0
    %s9 = scalar_lea.sflag [#allocation3], 1
    %10 = vsyncpa %s9, 0
    %11 = vsyncpa [#allocation4], 0
    %s12 = scalar_lea.sflag [#allocation4], 1
    %13 = vsyncpa %s12, 0
    %14 = vsyncpa [#allocation7], 0
    %s15 = scalar_lea.sflag [#allocation7], 1
    %16 = vsyncpa %s15, 0
    loop: start=0, step=1, limit=4
    $region2: #{tpu_custom_call.1} parent=1 // loop_pre_header
      _
    $region3: #{tpu_custom_call.1} parent=1 // loop_header
      %s18 = sphi 0, %s22
      %p19 = scmp.ge.s32.totalorder %s18, 4
      %s25 = sphi 0, %s44
      %s26 = sphi 0, %s40
      %s27 = sphi 0, %s36
      %s28 = sphi 0, %s25
      %s29 = sphi 0, %s26
      %s30 = sphi 0, %s27
      %s31 = sphi 0, %s28
      %s32 = sphi 0, %s29
      %s33 = sphi 0, %s30
      %s51 = sphi 0, %s53
      %s54 = sphi 0, %s51
      %s55 = sphi 0, %s54
      %s71 = sphi 0, %s55
      %s79 = sphi 0, %s81
      %s82 = sphi 0, %s79
      %s83 = sphi 0, %s82
      %s99 = sphi 0, %s83
      %s107 = sphi 0, %s109
      %s110 = sphi 0, %s107
      %s111 = sphi 0, %s110
      %s127 = sphi 0, %s111
    $region4: #{tpu_custom_call.1} parent=1 // loop_header_branch
      %21 = sbr.rel (%p19) target = $region8
    $region5: #{tpu_custom_call.1} parent=1 // loop_body
      %s23 = ssub.s32 %s18, 1
      %s24 = ssub.s32 %s18, 2
      %s34 = sadd.s32 1, %s27
      %p35 = scmp.ge.s32.totalorder %s34, 1
      %s36 = scalar_select %p35, 0, %s34
      %s37 = sadd.s32 1, %s26
      %s38 = scalar_select %p35, %s37, %s26
      %p39 = scmp.ge.s32.totalorder %s38, 1
      %s40 = scalar_select %p39, 0, %s38
      %s41 = sadd.s32 1, %s25
      %s42 = scalar_select %p39, %s41, %s25
      %p43 = scmp.ge.s32.totalorder %s42, 2
      %s44 = scalar_select %p43, 0, %s42
      %s45 = ssub.s32 %s25, %s44
      %s46 = ssub.s32 %s26, %s40
      %s47 = sor.u32 %s45, %s46
      %s48 = ssub.s32 %s27, %s36
      %s49 = sor.u32 %s47, %s48
      %p50 = scmp.eq.s32.totalorder %s49, 0
      %s52 = sadd.s32 %s51, 1
      %s53 = scalar_select %p50, %s51, %s52
      %p56 = pneg %p50
      %p57 = scmp.eq.s32.totalorder %s18, 1
      %p58 = por %p56, %p57
      %p59 = scmp.ne.s32.totalorder %s51, %s54
      %p60 = scmp.eq.s32.totalorder %s18, 0
      %p61 = por %p59, %p60
      %p62 = scmp.ne.s32.totalorder %s51, %s54
      %p63 = scmp.eq.s32.totalorder %s23, 1
      %p64 = por %p62, %p63
      %p65 = scmp.ne.s32.totalorder %s54, %s55
      %p66 = scmp.eq.s32.totalorder %s23, 0
      %p67 = por %p65, %p66
      %p68 = scmp.ne.s32.totalorder %s54, %s55
      %p69 = scmp.eq.s32.totalorder %s24, 1
      %p70 = por %p68, %p69
      %p72 = scmp.ne.s32.totalorder %s55, %s71
      %p73 = scmp.eq.s32.totalorder %s24, 0
      %p74 = por %p72, %p73
      %s75 = ssub.s32 %s25, %s44
      %s76 = ssub.s32 %s26, %s40
      %s77 = sor.u32 %s75, %s76
      %p78 = scmp.eq.s32.totalorder %s77, 0
      %s80 = sadd.s32 %s79, 1
      %s81 = scalar_select %p78, %s79, %s80
      %p84 = pneg %p78
      %p85 = scmp.eq.s32.totalorder %s18, 1
      %p86 = por %p84, %p85
      %p87 = scmp.ne.s32.totalorder %s79, %s82
      %p88 = scmp.eq.s32.totalorder %s18, 0
      %p89 = por %p87, %p88
      %p90 = scmp.ne.s32.totalorder %s79, %s82
      %p91 = scmp.eq.s32.totalorder %s23, 1
      %p92 = por %p90, %p91
      %p93 = scmp.ne.s32.totalorder %s82, %s83
      %p94 = scmp.eq.s32.totalorder %s23, 0
      %p95 = por %p93, %p94
      %p96 = scmp.ne.s32.totalorder %s82, %s83
      %p97 = scmp.eq.s32.totalorder %s24, 1
      %p98 = por %p96, %p97
      %p100 = scmp.ne.s32.totalorder %s83, %s99
      %p101 = scmp.eq.s32.totalorder %s24, 0
      %p102 = por %p100, %p101
      %s103 = ssub.s32 %s25, %s44
      %s104 = ssub.s32 %s26, %s40
      %s105 = sor.u32 %s103, %s104
      %p106 = scmp.eq.s32.totalorder %s105, 0
      %s108 = sadd.s32 %s107, 1
      %s109 = scalar_select %p106, %s107, %s108
      %p112 = pneg %p106
      %p113 = scmp.eq.s32.totalorder %s18, 1
      %p114 = por %p112, %p113
      %p115 = scmp.ne.s32.totalorder %s107, %s110
      %p116 = scmp.eq.s32.totalorder %s18, 0
      %p117 = por %p115, %p116
      %p118 = scmp.ne.s32.totalorder %s107, %s110
      %p119 = scmp.eq.s32.totalorder %s23, 1
      %p120 = por %p118, %p119
      %p121 = scmp.ne.s32.totalorder %s110, %s111
      %p122 = scmp.eq.s32.totalorder %s23, 0
      %p123 = por %p121, %p122
      %p124 = scmp.ne.s32.totalorder %s110, %s111
      %p125 = scmp.eq.s32.totalorder %s24, 1
      %p126 = por %p124, %p125
      %p128 = scmp.ne.s32.totalorder %s111, %s127
      %p129 = scmp.eq.s32.totalorder %s24, 0
      %p130 = por %p128, %p129
      %p131 = scmp.le.s32.totalorder 1, %s18
      %p132 = scmp.lt.s32.totalorder %s18, 3
      %p133 = pnand %p131, %p132
      %p134 = pneg %p133
      // Predicated region
      $region9: #{tpu_custom_call.1} parent=5 // pred_check
        _
      $region10: #{tpu_custom_call.1} parent=5 // pred_check_branch
        %136 = sbr.rel (%p133) target = $region12
      $region11: #{tpu_custom_call.1} parent=5 // pred_region
        %s137 = ssub.s32 %s18, 1
      $region12: #{tpu_custom_call.1} parent=5 // pred_fallthru
        _
      %p138 = scmp.lt.s32.totalorder %s18, 2
      // Predicated region
      $region13: #{tpu_custom_call.1} parent=5 // pred_check
        %p139 = pneg %p138
      $region14: #{tpu_custom_call.1} parent=5 // pred_check_branch
        %141 = sbr.rel (%p139) target = $region16
      $region15: #{tpu_custom_call.1} parent=5 // pred_region
        // Predicated region
        $region17: #{tpu_custom_call.1} parent=15 // pred_check
          %p142 = pneg %p61
        $region18: #{tpu_custom_call.1} parent=15 // pred_check_branch
          %144 = sbr.rel (%p142) target = $region20
        $region19: #{tpu_custom_call.1} parent=15 // pred_region
          %s145 = sand.u32 %s51, 1
          %s146 = scalar_lea.sflag [#allocation3], %s145
          %s147 = sand.u32 %s51, 1
          %s148 = smul.addr %s147, 64
          %s149 = scalar_lea.vmem [#allocation2], %s148
          %s150 = smul.u32 4, %s26
          %s151 = smul.u32 2, %s27
          %s153 = ssub.s32 1024, 1024
          %154 = vsyncadd %s146, %s153
          %s155 = smul.addr %s150, 2
          %s156 = sadd.s32 %s151, %s155
          %s157 = smul.addr %s25, 8
          %s158 = sadd.s32 %s156, %s157
          %s159 = smul.addr %s158, 128
          %s160 = scalar_lea.hbm %s0, %s159
          %s161 = sshll.u32 %s149, 4
          %s162 = int_to_ptr.vmem [resolvable:$true] %s161
          %167 = dma.hbm_to_vmem [thread:$0]  %s160, 1024, %s162, %s146, 256, 256, 16
        $region20: #{tpu_custom_call.1} parent=15 // pred_fallthru
          _
      $region16: #{tpu_custom_call.1} parent=5 // pred_fallthru
        _
      %p168 = scmp.le.s32.totalorder 1, %s18
      %p169 = scmp.lt.s32.totalorder %s18, 3
      %p170 = pnand %p168, %p169
      %p171 = pneg %p170
      // Predicated region
      $region21: #{tpu_custom_call.1} parent=5 // pred_check
        _
      $region22: #{tpu_custom_call.1} parent=5 // pred_check_branch
        %173 = sbr.rel (%p170) target = $region24
      $region23: #{tpu_custom_call.1} parent=5 // pred_region
        %s174 = ssub.s32 %s18, 1
        %s175 = sand.u32 %s54, 1
        %s176 = scalar_lea.sflag [#allocation3], %s175
        %s177 = sand.u32 %s54, 1
        %s178 = smul.addr %s177, 64
        %s179 = scalar_lea.vmem [#allocation2], %s178
        // Predicated region
        $region25: #{tpu_custom_call.1} parent=23 // pred_check
          %p180 = pneg %p67
        $region26: #{tpu_custom_call.1} parent=23 // pred_check_branch
          %182 = sbr.rel (%p180) target = $region28
        $region27: #{tpu_custom_call.1} parent=23 // pred_region
          %183 = dma.done %s176, 1024
        $region28: #{tpu_custom_call.1} parent=23 // pred_fallthru
          _
        %s184 = sand.u32 %s54, 1
        %s185 = scalar_lea.sflag [#allocation3], %s184
        %s186 = sand.u32 %s54, 1
        %s187 = smul.addr %s186, 64
        %s188 = scalar_lea.vmem [#allocation2], %s187
        %p189 = pneg %p67
        %p190 = pneg %p64
        %p191 = pneg %p95
        %p192 = pneg %p92
        %s193 = sand.u32 %s82, 1
        %s194 = scalar_lea.sflag [#allocation4], %s193
        %s195 = sand.u32 %s82, 1
        %s196 = scalar_lea.vmem [#allocation5], %s195
        %p197 = pneg %p123
        %p198 = pneg %p120
        %s199 = sand.u32 %s110, 1
        %s200 = scalar_lea.sflag [#allocation7], %s199
        %s201 = sand.u32 %s110, 1
        %s202 = scalar_lea.vmem [#allocation6], %s201
        %s203 = smul.u32 4, %s29
        %s204 = smul.u32 2, %s30
        %p205 = scmp.eq.s32.totalorder %s30, 0
        // Predicated region
        $region29: #{tpu_custom_call.1} parent=23 // pred_check
          %p206 = pneg %p205
        $region30: #{tpu_custom_call.1} parent=23 // pred_check_branch
          %208 = sbr.rel (%p206) target = $region32
        $region31: #{tpu_custom_call.1} parent=23 // pred_region
          %vm209 = vcmask 253952
          %210 = vst.msk [vmem:[%s196] sm:$0x1] %vm209, 0.0
          %211 = vst.msk [vmem:[%s202] sm:$0x1] %vm209, -inf
        $region32: #{tpu_custom_call.1} parent=23 // pred_fallthru
          _
        %v212 = vld [vmem:[%s179] sm:$0xff]
        %v213 = vld [vmem:[%s179 + $0x8] sm:$0xff]
        %v214 = vld [vmem:[%s179 + $0x10] sm:$0xff]
        %v215 = vld [vmem:[%s179 + $0x18] sm:$0xff]
        %v216 = vld [vmem:[%s179 + $0x20] sm:$0xff]
        %v217 = vld [vmem:[%s179 + $0x28] sm:$0xff]
        %v218 = vld [vmem:[%s179 + $0x30] sm:$0xff]
        %v219 = vld [vmem:[%s179 + $0x38] sm:$0xff]
        %v220 = vld [vmem:[%s196] sm:$0x1]
        %v221 = vadd.f32 %v212, %v213
        %222 = vadd.xlane.f32.xlu0 %v221
        %v223 = vpop.xlane.xlu0 %222
        %v224 = vadd.f32 %v214, %v215
        %225 = vadd.xlane.f32.xlu0 %v224
        %v226 = vpop.xlane.xlu0 %225
        %v227 = vadd.f32 %v216, %v217
        %228 = vadd.xlane.f32.xlu0 %v227
        %v229 = vpop.xlane.xlu0 %228
        %v230 = vadd.f32 %v218, %v219
        %231 = vadd.xlane.f32.xlu0 %v230
        %v232 = vpop.xlane.xlu0 %231
        %v237 = vlaneseq
        %v238 = vshrl.u32 %v237, 7
        %v239 = vsub.s32 0, %v238
        %v240 = vrot.slane %v223, %v239
        %v241 = vlaneseq
        %v242 = vshrl.u32 %v241, 7
        %v243 = vsub.s32 1, %v242
        %v244 = vrot.slane %v223, %v243
        %v245 = vlaneseq
        %v246 = vshrl.u32 %v245, 7
        %v247 = vsub.s32 2, %v246
        %v248 = vrot.slane %v223, %v247
        %v249 = vlaneseq
        %v250 = vshrl.u32 %v249, 7
        %v251 = vsub.s32 3, %v250
        %v252 = vrot.slane %v223, %v251
        %v253 = vlaneseq
        %v254 = vshrl.u32 %v253, 7
        %v255 = vsub.s32 4, %v254
        %v256 = vrot.slane %v223, %v255
        %v257 = vlaneseq
        %v258 = vshrl.u32 %v257, 7
        %v259 = vsub.s32 5, %v258
        %v260 = vrot.slane %v223, %v259
        %v261 = vlaneseq
        %v262 = vshrl.u32 %v261, 7
        %v263 = vsub.s32 6, %v262
        %v264 = vrot.slane %v223, %v263
        %v265 = vlaneseq
        %v266 = vshrl.u32 %v265, 7
        %v267 = vsub.s32 7, %v266
        %v268 = vrot.slane %v223, %v267
        %v269 = vlaneseq
        %v270 = vshrl.u32 %v269, 7
        %v271 = vsub.s32 0, %v270
        %v272 = vrot.slane %v226, %v271
        %v273 = vlaneseq
        %v274 = vshrl.u32 %v273, 7
        %v275 = vsub.s32 1, %v274
        %v276 = vrot.slane %v226, %v275
        %v277 = vlaneseq
        %v278 = vshrl.u32 %v277, 7
        %v279 = vsub.s32 2, %v278
        %v280 = vrot.slane %v226, %v279
        %v281 = vlaneseq
        %v282 = vshrl.u32 %v281, 7
        %v283 = vsub.s32 3, %v282
        %v284 = vrot.slane %v226, %v283
        %v285 = vlaneseq
        %v286 = vshrl.u32 %v285, 7
        %v287 = vsub.s32 4, %v286
        %v288 = vrot.slane %v226, %v287
        %v289 = vlaneseq
        %v290 = vshrl.u32 %v289, 7
        %v291 = vsub.s32 5, %v290
        %v292 = vrot.slane %v226, %v291
        %v293 = vlaneseq
        %v294 = vshrl.u32 %v293, 7
        %v295 = vsub.s32 6, %v294
        %v296 = vrot.slane %v226, %v295
        %v297 = vlaneseq
        %v298 = vshrl.u32 %v297, 7
        %v299 = vsub.s32 7, %v298
        %v300 = vrot.slane %v226, %v299
        %v301 = vlaneseq
        %v302 = vshrl.u32 %v301, 7
        %v303 = vsub.s32 0, %v302
        %v304 = vrot.slane %v229, %v303
        %v305 = vlaneseq
        %v306 = vshrl.u32 %v305, 7
        %v307 = vsub.s32 1, %v306
        %v308 = vrot.slane %v229, %v307
        %v309 = vlaneseq
        %v310 = vshrl.u32 %v309, 7
        %v311 = vsub.s32 2, %v310
        %v312 = vrot.slane %v229, %v311
        %v313 = vlaneseq
        %v314 = vshrl.u32 %v313, 7
        %v315 = vsub.s32 3, %v314
        %v316 = vrot.slane %v229, %v315
        %v317 = vlaneseq
        %v318 = vshrl.u32 %v317, 7
        %v319 = vsub.s32 4, %v318
        %v320 = vrot.slane %v229, %v319
        %v321 = vlaneseq
        %v322 = vshrl.u32 %v321, 7
        %v323 = vsub.s32 5, %v322
        %v324 = vrot.slane %v229, %v323
        %v325 = vlaneseq
        %v326 = vshrl.u32 %v325, 7
        %v327 = vsub.s32 6, %v326
        %v328 = vrot.slane %v229, %v327
        %v329 = vlaneseq
        %v330 = vshrl.u32 %v329, 7
        %v331 = vsub.s32 7, %v330
        %v332 = vrot.slane %v229, %v331
        %v333 = vlaneseq
        %v334 = vshrl.u32 %v333, 7
        %v335 = vsub.s32 0, %v334
        %v336 = vrot.slane %v232, %v335
        %v337 = vlaneseq
        %v338 = vshrl.u32 %v337, 7
        %v339 = vsub.s32 1, %v338
        %v340 = vrot.slane %v232, %v339
        %v341 = vlaneseq
        %v342 = vshrl.u32 %v341, 7
        %v343 = vsub.s32 2, %v342
        %v344 = vrot.slane %v232, %v343
        %v345 = vlaneseq
        %v346 = vshrl.u32 %v345, 7
        %v347 = vsub.s32 3, %v346
        %v348 = vrot.slane %v232, %v347
        %v349 = vlaneseq
        %v350 = vshrl.u32 %v349, 7
        %v351 = vsub.s32 4, %v350
        %v352 = vrot.slane %v232, %v351
        %v353 = vlaneseq
        %v354 = vshrl.u32 %v353, 7
        %v355 = vsub.s32 5, %v354
        %v356 = vrot.slane %v232, %v355
        %v357 = vlaneseq
        %v358 = vshrl.u32 %v357, 7
        %v359 = vsub.s32 6, %v358
        %v360 = vrot.slane %v232, %v359
        %v361 = vlaneseq
        %v362 = vshrl.u32 %v361, 7
        %v363 = vsub.s32 7, %v362
        %v364 = vrot.slane %v232, %v363
        %v365 = vcombine.low %v240, %v244
        %v366 = vcombine.low %v248, %v252
        %v367 = vcombine.low %v256, %v260
        %v368 = vcombine.low %v264, %v268
        %v370 = vunpack.c.l.s4 1966171168
        %v371 = vunpack.c.0.s8 %v370
        %v372 = vlaneseq
        %v373 = vshrl.u32 %v372, 7
        %v374 = vsub.s32 %v371, %v373
        %v375 = vrot.slane %v365, %v374
        %v377 = vunpack.c.l.s4 1966171168
        %v378 = vunpack.c.0.s8 %v377
        %v379 = vlaneseq
        %v380 = vshrl.u32 %v379, 7
        %v381 = vsub.s32 %v378, %v380
        %v382 = vrot.slane %v366, %v381
        %v384 = vunpack.c.l.s4 1966171168
        %v385 = vunpack.c.0.s8 %v384
        %v386 = vlaneseq
        %v387 = vshrl.u32 %v386, 7
        %v388 = vsub.s32 %v385, %v387
        %v389 = vrot.slane %v367, %v388
        %v391 = vunpack.c.l.s4 1966171168
        %v392 = vunpack.c.0.s8 %v391
        %v393 = vlaneseq
        %v394 = vshrl.u32 %v393, 7
        %v395 = vsub.s32 %v392, %v394
        %v396 = vrot.slane %v368, %v395
        %v397 = vcombine.low %v375, %v382
        %v398 = vcombine.low %v389, %v396
        %v400 = vunpack.c.l.s4 1966171168
        %v401 = vunpack.c.0.s8 %v400
        %v402 = vlaneseq
        %v403 = vshrl.u32 %v402, 7
        %v404 = vsub.s32 %v401, %v403
        %v405 = vrot.slane %v397, %v404
        %v407 = vunpack.c.l.s4 1966171168
        %v408 = vunpack.c.0.s8 %v407
        %v409 = vlaneseq
        %v410 = vshrl.u32 %v409, 7
        %v411 = vsub.s32 %v408, %v410
        %v412 = vrot.slane %v398, %v411
        %v413 = vcombine.low %v405, %v412
        %v414 = vcombine.low %v272, %v276
        %v415 = vcombine.low %v280, %v284
        %v416 = vcombine.low %v288, %v292
        %v417 = vcombine.low %v296, %v300
        %v419 = vunpack.c.l.s4 1966171168
        %v420 = vunpack.c.0.s8 %v419
        %v421 = vlaneseq
        %v422 = vshrl.u32 %v421, 7
        %v423 = vsub.s32 %v420, %v422
        %v424 = vrot.slane %v414, %v423
        %v426 = vunpack.c.l.s4 1966171168
        %v427 = vunpack.c.0.s8 %v426
        %v428 = vlaneseq
        %v429 = vshrl.u32 %v428, 7
        %v430 = vsub.s32 %v427, %v429
        %v431 = vrot.slane %v415, %v430
        %v433 = vunpack.c.l.s4 1966171168
        %v434 = vunpack.c.0.s8 %v433
        %v435 = vlaneseq
        %v436 = vshrl.u32 %v435, 7
        %v437 = vsub.s32 %v434, %v436
        %v438 = vrot.slane %v416, %v437
        %v440 = vunpack.c.l.s4 1966171168
        %v441 = vunpack.c.0.s8 %v440
        %v442 = vlaneseq
        %v443 = vshrl.u32 %v442, 7
        %v444 = vsub.s32 %v441, %v443
        %v445 = vrot.slane %v417, %v444
        %v446 = vcombine.low %v424, %v431
        %v447 = vcombine.low %v438, %v445
        %v449 = vunpack.c.l.s4 1966171168
        %v450 = vunpack.c.0.s8 %v449
        %v451 = vlaneseq
        %v452 = vshrl.u32 %v451, 7
        %v453 = vsub.s32 %v450, %v452
        %v454 = vrot.slane %v446, %v453
        %v456 = vunpack.c.l.s4 1966171168
        %v457 = vunpack.c.0.s8 %v456
        %v458 = vlaneseq
        %v459 = vshrl.u32 %v458, 7
        %v460 = vsub.s32 %v457, %v459
        %v461 = vrot.slane %v447, %v460
        %v462 = vcombine.low %v454, %v461
        %v463 = vcombine.low %v304, %v308
        %v464 = vcombine.low %v312, %v316
        %v465 = vcombine.low %v320, %v324
        %v466 = vcombine.low %v328, %v332
        %v468 = vunpack.c.l.s4 1966171168
        %v469 = vunpack.c.0.s8 %v468
        %v470 = vlaneseq
        %v471 = vshrl.u32 %v470, 7
        %v472 = vsub.s32 %v469, %v471
        %v473 = vrot.slane %v463, %v472
        %v475 = vunpack.c.l.s4 1966171168
        %v476 = vunpack.c.0.s8 %v475
        %v477 = vlaneseq
        %v478 = vshrl.u32 %v477, 7
        %v479 = vsub.s32 %v476, %v478
        %v480 = vrot.slane %v464, %v479
        %v482 = vunpack.c.l.s4 1966171168
        %v483 = vunpack.c.0.s8 %v482
        %v484 = vlaneseq
        %v485 = vshrl.u32 %v484, 7
        %v486 = vsub.s32 %v483, %v485
        %v487 = vrot.slane %v465, %v486
        %v489 = vunpack.c.l.s4 1966171168
        %v490 = vunpack.c.0.s8 %v489
        %v491 = vlaneseq
        %v492 = vshrl.u32 %v491, 7
        %v493 = vsub.s32 %v490, %v492
        %v494 = vrot.slane %v466, %v493
        %v495 = vcombine.low %v473, %v480
        %v496 = vcombine.low %v487, %v494
        %v498 = vunpack.c.l.s4 1966171168
        %v499 = vunpack.c.0.s8 %v498
        %v500 = vlaneseq
        %v501 = vshrl.u32 %v500, 7
        %v502 = vsub.s32 %v499, %v501
        %v503 = vrot.slane %v495, %v502
        %v505 = vunpack.c.l.s4 1966171168
        %v506 = vunpack.c.0.s8 %v505
        %v507 = vlaneseq
        %v508 = vshrl.u32 %v507, 7
        %v509 = vsub.s32 %v506, %v508
        %v510 = vrot.slane %v496, %v509
        %v511 = vcombine.low %v503, %v510
        %v512 = vcombine.low %v336, %v340
        %v513 = vcombine.low %v344, %v348
        %v514 = vcombine.low %v352, %v356
        %v515 = vcombine.low %v360, %v364
        %v517 = vunpack.c.l.s4 1966171168
        %v518 = vunpack.c.0.s8 %v517
        %v519 = vlaneseq
        %v520 = vshrl.u32 %v519, 7
        %v521 = vsub.s32 %v518, %v520
        %v522 = vrot.slane %v512, %v521
        %v524 = vunpack.c.l.s4 1966171168
        %v525 = vunpack.c.0.s8 %v524
        %v526 = vlaneseq
        %v527 = vshrl.u32 %v526, 7
        %v528 = vsub.s32 %v525, %v527
        %v529 = vrot.slane %v513, %v528
        %v531 = vunpack.c.l.s4 1966171168
        %v532 = vunpack.c.0.s8 %v531
        %v533 = vlaneseq
        %v534 = vshrl.u32 %v533, 7
        %v535 = vsub.s32 %v532, %v534
        %v536 = vrot.slane %v514, %v535
        %v538 = vunpack.c.l.s4 1966171168
        %v539 = vunpack.c.0.s8 %v538
        %v540 = vlaneseq
        %v541 = vshrl.u32 %v540, 7
        %v542 = vsub.s32 %v539, %v541
        %v543 = vrot.slane %v515, %v542
        %v544 = vcombine.low %v522, %v529
        %v545 = vcombine.low %v536, %v543
        %v547 = vunpack.c.l.s4 1966171168
        %v548 = vunpack.c.0.s8 %v547
        %v549 = vlaneseq
        %v550 = vshrl.u32 %v549, 7
        %v551 = vsub.s32 %v548, %v550
        %v552 = vrot.slane %v544, %v551
        %v554 = vunpack.c.l.s4 1966171168
        %v555 = vunpack.c.0.s8 %v554
        %v556 = vlaneseq
        %v557 = vshrl.u32 %v556, 7
        %v558 = vsub.s32 %v555, %v557
        %v559 = vrot.slane %v545, %v558
        %v560 = vcombine.low %v552, %v559
        %561 = vset.pattern.permute.xlu0 0
        %562 = vperm.xlu0 %561, %v413
        %v563 = vpop.permute.xlu0 %562
        %564 = vset.pattern.permute.xlu0 0
        %565 = vperm.xlu0 %564, %v462
        %v566 = vpop.permute.xlu0 %565
        %567 = vset.pattern.permute.xlu0 0
        %568 = vperm.xlu0 %567, %v511
        %v569 = vpop.permute.xlu0 %568
        %570 = vset.pattern.permute.xlu0 0
        %571 = vperm.xlu0 %570, %v560
        %v572 = vpop.permute.xlu0 %571
        %v573 = vlaneseq
        %v574 = vand.u32 %v573, 127
        %v575 = vlaneseq
        %v576 = vshrl.u32 %v575, 7
        %v577 = vsub.s32 %v574, %v576
        %v578 = vrot.slane %v563, %v577
        %v579 = vadd.s32 %v574, 4294967288
        %v580 = vlaneseq
        %v581 = vshrl.u32 %v580, 7
        %v582 = vsub.s32 %v579, %v581
        %v583 = vrot.slane %v566, %v582
        %vm584 = vcmask 130112
        %v585 = vsel %vm584, %v583, %v578
        %v586 = vadd.s32 %v574, 4294967280
        %v587 = vlaneseq
        %v588 = vshrl.u32 %v587, 7
        %v589 = vsub.s32 %v586, %v588
        %v590 = vrot.slane %v569, %v589
        %vm591 = vcmask 195712
        %v592 = vsel %vm591, %v590, %v585
        %v593 = vadd.s32 %v574, 4294967272
        %v594 = vlaneseq
        %v595 = vshrl.u32 %v594, 7
        %v596 = vsub.s32 %v593, %v595
        %v597 = vrot.slane %v572, %v596
        %vm598 = vcmask 261312
        %v599 = vsel %vm598, %v597, %v592
        %v601 = vunpack.c.l.s4 1966171168
        %v602 = vunpack.c.0.s8 %v601
        %v603 = vlaneseq
        %v604 = vshrl.u32 %v603, 7
        %v605 = vsub.s32 %v602, %v604
        %v606 = vrot.slane %v599, %v605
        %v608 = vunpack.c.l.s4 1966171168
        %v609 = vunpack.c.0.s8 %v608
        %v610 = vlaneseq
        %v611 = vshrl.u32 %v610, 7
        %v612 = vsub.s32 %v609, %v611
        %v613 = vrot.slane %v606, %v612
        %v615 = vadd.f32 %v220, %v613
        %vm616 = vcmask 253952
        %617 = vst.msk [vmem:[%s196] sm:$0x1] %vm616, %v615
        %v618 = vld [vmem:[%s202] sm:$0x1]
        %v619 = vmax.f32 %v212, %v213
        %620 = vmax.xlane.f32.xlu0 %v619
        %v621 = vpop.xlane.xlu0 %620
        %v622 = vmax.f32 %v214, %v215
        %623 = vmax.xlane.f32.xlu0 %v622
        %v624 = vpop.xlane.xlu0 %623
        %v625 = vmax.f32 %v216, %v217
        %626 = vmax.xlane.f32.xlu0 %v625
        %v627 = vpop.xlane.xlu0 %626
        %v628 = vmax.f32 %v218, %v219
        %629 = vmax.xlane.f32.xlu0 %v628
        %v630 = vpop.xlane.xlu0 %629
        %v635 = vlaneseq
        %v636 = vshrl.u32 %v635, 7
        %v637 = vsub.s32 0, %v636
        %v638 = vrot.slane %v621, %v637
        %v639 = vlaneseq
        %v640 = vshrl.u32 %v639, 7
        %v641 = vsub.s32 1, %v640
        %v642 = vrot.slane %v621, %v641
        %v643 = vlaneseq
        %v644 = vshrl.u32 %v643, 7
        %v645 = vsub.s32 2, %v644
        %v646 = vrot.slane %v621, %v645
        %v647 = vlaneseq
        %v648 = vshrl.u32 %v647, 7
        %v649 = vsub.s32 3, %v648
        %v650 = vrot.slane %v621, %v649
        %v651 = vlaneseq
        %v652 = vshrl.u32 %v651, 7
        %v653 = vsub.s32 4, %v652
        %v654 = vrot.slane %v621, %v653
        %v655 = vlaneseq
        %v656 = vshrl.u32 %v655, 7
        %v657 = vsub.s32 5, %v656
        %v658 = vrot.slane %v621, %v657
        %v659 = vlaneseq
        %v660 = vshrl.u32 %v659, 7
        %v661 = vsub.s32 6, %v660
        %v662 = vrot.slane %v621, %v661
        %v663 = vlaneseq
        %v664 = vshrl.u32 %v663, 7
        %v665 = vsub.s32 7, %v664
        %v666 = vrot.slane %v621, %v665
        %v667 = vlaneseq
        %v668 = vshrl.u32 %v667, 7
        %v669 = vsub.s32 0, %v668
        %v670 = vrot.slane %v624, %v669
        %v671 = vlaneseq
        %v672 = vshrl.u32 %v671, 7
        %v673 = vsub.s32 1, %v672
        %v674 = vrot.slane %v624, %v673
        %v675 = vlaneseq
        %v676 = vshrl.u32 %v675, 7
        %v677 = vsub.s32 2, %v676
        %v678 = vrot.slane %v624, %v677
        %v679 = vlaneseq
        %v680 = vshrl.u32 %v679, 7
        %v681 = vsub.s32 3, %v680
        %v682 = vrot.slane %v624, %v681
        %v683 = vlaneseq
        %v684 = vshrl.u32 %v683, 7
        %v685 = vsub.s32 4, %v684
        %v686 = vrot.slane %v624, %v685
        %v687 = vlaneseq
        %v688 = vshrl.u32 %v687, 7
        %v689 = vsub.s32 5, %v688
        %v690 = vrot.slane %v624, %v689
        %v691 = vlaneseq
        %v692 = vshrl.u32 %v691, 7
        %v693 = vsub.s32 6, %v692
        %v694 = vrot.slane %v624, %v693
        %v695 = vlaneseq
        %v696 = vshrl.u32 %v695, 7
        %v697 = vsub.s32 7, %v696
        %v698 = vrot.slane %v624, %v697
        %v699 = vlaneseq
        %v700 = vshrl.u32 %v699, 7
        %v701 = vsub.s32 0, %v700
        %v702 = vrot.slane %v627, %v701
        %v703 = vlaneseq
        %v704 = vshrl.u32 %v703, 7
        %v705 = vsub.s32 1, %v704
        %v706 = vrot.slane %v627, %v705
        %v707 = vlaneseq
        %v708 = vshrl.u32 %v707, 7
        %v709 = vsub.s32 2, %v708
        %v710 = vrot.slane %v627, %v709
        %v711 = vlaneseq
        %v712 = vshrl.u32 %v711, 7
        %v713 = vsub.s32 3, %v712
        %v714 = vrot.slane %v627, %v713
        %v715 = vlaneseq
        %v716 = vshrl.u32 %v715, 7
        %v717 = vsub.s32 4, %v716
        %v718 = vrot.slane %v627, %v717
        %v719 = vlaneseq
        %v720 = vshrl.u32 %v719, 7
        %v721 = vsub.s32 5, %v720
        %v722 = vrot.slane %v627, %v721
        %v723 = vlaneseq
        %v724 = vshrl.u32 %v723, 7
        %v725 = vsub.s32 6, %v724
        %v726 = vrot.slane %v627, %v725
        %v727 = vlaneseq
        %v728 = vshrl.u32 %v727, 7
        %v729 = vsub.s32 7, %v728
        %v730 = vrot.slane %v627, %v729
        %v731 = vlaneseq
        %v732 = vshrl.u32 %v731, 7
        %v733 = vsub.s32 0, %v732
        %v734 = vrot.slane %v630, %v733
        %v735 = vlaneseq
        %v736 = vshrl.u32 %v735, 7
        %v737 = vsub.s32 1, %v736
        %v738 = vrot.slane %v630, %v737
        %v739 = vlaneseq
        %v740 = vshrl.u32 %v739, 7
        %v741 = vsub.s32 2, %v740
        %v742 = vrot.slane %v630, %v741
        %v743 = vlaneseq
        %v744 = vshrl.u32 %v743, 7
        %v745 = vsub.s32 3, %v744
        %v746 = vrot.slane %v630, %v745
        %v747 = vlaneseq
        %v748 = vshrl.u32 %v747, 7
        %v749 = vsub.s32 4, %v748
        %v750 = vrot.slane %v630, %v749
        %v751 = vlaneseq
        %v752 = vshrl.u32 %v751, 7
        %v753 = vsub.s32 5, %v752
        %v754 = vrot.slane %v630, %v753
        %v755 = vlaneseq
        %v756 = vshrl.u32 %v755, 7
        %v757 = vsub.s32 6, %v756
        %v758 = vrot.slane %v630, %v757
        %v759 = vlaneseq
        %v760 = vshrl.u32 %v759, 7
        %v761 = vsub.s32 7, %v760
        %v762 = vrot.slane %v630, %v761
        %v763 = vcombine.low %v638, %v642
        %v764 = vcombine.low %v646, %v650
        %v765 = vcombine.low %v654, %v658
        %v766 = vcombine.low %v662, %v666
        %v768 = vunpack.c.l.s4 1966171168
        %v769 = vunpack.c.0.s8 %v768
        %v770 = vlaneseq
        %v771 = vshrl.u32 %v770, 7
        %v772 = vsub.s32 %v769, %v771
        %v773 = vrot.slane %v763, %v772
        %v775 = vunpack.c.l.s4 1966171168
        %v776 = vunpack.c.0.s8 %v775
        %v777 = vlaneseq
        %v778 = vshrl.u32 %v777, 7
        %v779 = vsub.s32 %v776, %v778
        %v780 = vrot.slane %v764, %v779
        %v782 = vunpack.c.l.s4 1966171168
        %v783 = vunpack.c.0.s8 %v782
        %v784 = vlaneseq
        %v785 = vshrl.u32 %v784, 7
        %v786 = vsub.s32 %v783, %v785
        %v787 = vrot.slane %v765, %v786
        %v789 = vunpack.c.l.s4 1966171168
        %v790 = vunpack.c.0.s8 %v789
        %v791 = vlaneseq
        %v792 = vshrl.u32 %v791, 7
        %v793 = vsub.s32 %v790, %v792
        %v794 = vrot.slane %v766, %v793
        %v795 = vcombine.low %v773, %v780
        %v796 = vcombine.low %v787, %v794
        %v798 = vunpack.c.l.s4 1966171168
        %v799 = vunpack.c.0.s8 %v798
        %v800 = vlaneseq
        %v801 = vshrl.u32 %v800, 7
        %v802 = vsub.s32 %v799, %v801
        %v803 = vrot.slane %v795, %v802
        %v805 = vunpack.c.l.s4 1966171168
        %v806 = vunpack.c.0.s8 %v805
        %v807 = vlaneseq
        %v808 = vshrl.u32 %v807, 7
        %v809 = vsub.s32 %v806, %v808
        %v810 = vrot.slane %v796, %v809
        %v811 = vcombine.low %v803, %v810
        %v812 = vcombine.low %v670, %v674
        %v813 = vcombine.low %v678, %v682
        %v814 = vcombine.low %v686, %v690
        %v815 = vcombine.low %v694, %v698
        %v817 = vunpack.c.l.s4 1966171168
        %v818 = vunpack.c.0.s8 %v817
        %v819 = vlaneseq
        %v820 = vshrl.u32 %v819, 7
        %v821 = vsub.s32 %v818, %v820
        %v822 = vrot.slane %v812, %v821
        %v824 = vunpack.c.l.s4 1966171168
        %v825 = vunpack.c.0.s8 %v824
        %v826 = vlaneseq
        %v827 = vshrl.u32 %v826, 7
        %v828 = vsub.s32 %v825, %v827
        %v829 = vrot.slane %v813, %v828
        %v831 = vunpack.c.l.s4 1966171168
        %v832 = vunpack.c.0.s8 %v831
        %v833 = vlaneseq
        %v834 = vshrl.u32 %v833, 7
        %v835 = vsub.s32 %v832, %v834
        %v836 = vrot.slane %v814, %v835
        %v838 = vunpack.c.l.s4 1966171168
        %v839 = vunpack.c.0.s8 %v838
        %v840 = vlaneseq
        %v841 = vshrl.u32 %v840, 7
        %v842 = vsub.s32 %v839, %v841
        %v843 = vrot.slane %v815, %v842
        %v844 = vcombine.low %v822, %v829
        %v845 = vcombine.low %v836, %v843
        %v847 = vunpack.c.l.s4 1966171168
        %v848 = vunpack.c.0.s8 %v847
        %v849 = vlaneseq
        %v850 = vshrl.u32 %v849, 7
        %v851 = vsub.s32 %v848, %v850
        %v852 = vrot.slane %v844, %v851
        %v854 = vunpack.c.l.s4 1966171168
        %v855 = vunpack.c.0.s8 %v854
        %v856 = vlaneseq
        %v857 = vshrl.u32 %v856, 7
        %v858 = vsub.s32 %v855, %v857
        %v859 = vrot.slane %v845, %v858
        %v860 = vcombine.low %v852, %v859
        %v861 = vcombine.low %v702, %v706
        %v862 = vcombine.low %v710, %v714
        %v863 = vcombine.low %v718, %v722
        %v864 = vcombine.low %v726, %v730
        %v866 = vunpack.c.l.s4 1966171168
        %v867 = vunpack.c.0.s8 %v866
        %v868 = vlaneseq
        %v869 = vshrl.u32 %v868, 7
        %v870 = vsub.s32 %v867, %v869
        %v871 = vrot.slane %v861, %v870
        %v873 = vunpack.c.l.s4 1966171168
        %v874 = vunpack.c.0.s8 %v873
        %v875 = vlaneseq
        %v876 = vshrl.u32 %v875, 7
        %v877 = vsub.s32 %v874, %v876
        %v878 = vrot.slane %v862, %v877
        %v880 = vunpack.c.l.s4 1966171168
        %v881 = vunpack.c.0.s8 %v880
        %v882 = vlaneseq
        %v883 = vshrl.u32 %v882, 7
        %v884 = vsub.s32 %v881, %v883
        %v885 = vrot.slane %v863, %v884
        %v887 = vunpack.c.l.s4 1966171168
        %v888 = vunpack.c.0.s8 %v887
        %v889 = vlaneseq
        %v890 = vshrl.u32 %v889, 7
        %v891 = vsub.s32 %v888, %v890
        %v892 = vrot.slane %v864, %v891
        %v893 = vcombine.low %v871, %v878
        %v894 = vcombine.low %v885, %v892
        %v896 = vunpack.c.l.s4 1966171168
        %v897 = vunpack.c.0.s8 %v896
        %v898 = vlaneseq
        %v899 = vshrl.u32 %v898, 7
        %v900 = vsub.s32 %v897, %v899
        %v901 = vrot.slane %v893, %v900
        %v903 = vunpack.c.l.s4 1966171168
        %v904 = vunpack.c.0.s8 %v903
        %v905 = vlaneseq
        %v906 = vshrl.u32 %v905, 7
        %v907 = vsub.s32 %v904, %v906
        %v908 = vrot.slane %v894, %v907
        %v909 = vcombine.low %v901, %v908
        %v910 = vcombine.low %v734, %v738
        %v911 = vcombine.low %v742, %v746
        %v912 = vcombine.low %v750, %v754
        %v913 = vcombine.low %v758, %v762
        %v915 = vunpack.c.l.s4 1966171168
        %v916 = vunpack.c.0.s8 %v915
        %v917 = vlaneseq
        %v918 = vshrl.u32 %v917, 7
        %v919 = vsub.s32 %v916, %v918
        %v920 = vrot.slane %v910, %v919
        %v922 = vunpack.c.l.s4 1966171168
        %v923 = vunpack.c.0.s8 %v922
        %v924 = vlaneseq
        %v925 = vshrl.u32 %v924, 7
        %v926 = vsub.s32 %v923, %v925
        %v927 = vrot.slane %v911, %v926
        %v929 = vunpack.c.l.s4 1966171168
        %v930 = vunpack.c.0.s8 %v929
        %v931 = vlaneseq
        %v932 = vshrl.u32 %v931, 7
        %v933 = vsub.s32 %v930, %v932
        %v934 = vrot.slane %v912, %v933
        %v936 = vunpack.c.l.s4 1966171168
        %v937 = vunpack.c.0.s8 %v936
        %v938 = vlaneseq
        %v939 = vshrl.u32 %v938, 7
        %v940 = vsub.s32 %v937, %v939
        %v941 = vrot.slane %v913, %v940
        %v942 = vcombine.low %v920, %v927
        %v943 = vcombine.low %v934, %v941
        %v945 = vunpack.c.l.s4 1966171168
        %v946 = vunpack.c.0.s8 %v945
        %v947 = vlaneseq
        %v948 = vshrl.u32 %v947, 7
        %v949 = vsub.s32 %v946, %v948
        %v950 = vrot.slane %v942, %v949
        %v952 = vunpack.c.l.s4 1966171168
        %v953 = vunpack.c.0.s8 %v952
        %v954 = vlaneseq
        %v955 = vshrl.u32 %v954, 7
        %v956 = vsub.s32 %v953, %v955
        %v957 = vrot.slane %v943, %v956
        %v958 = vcombine.low %v950, %v957
        %959 = vset.pattern.permute.xlu0 0
        %960 = vperm.xlu0 %959, %v811
        %v961 = vpop.permute.xlu0 %960
        %962 = vset.pattern.permute.xlu0 0
        %963 = vperm.xlu0 %962, %v860
        %v964 = vpop.permute.xlu0 %963
        %965 = vset.pattern.permute.xlu0 0
        %966 = vperm.xlu0 %965, %v909
        %v967 = vpop.permute.xlu0 %966
        %968 = vset.pattern.permute.xlu0 0
        %969 = vperm.xlu0 %968, %v958
        %v970 = vpop.permute.xlu0 %969
        %v971 = vlaneseq
        %v972 = vshrl.u32 %v971, 7
        %v973 = vsub.s32 %v574, %v972
        %v974 = vrot.slane %v961, %v973
        %v975 = vlaneseq
        %v976 = vshrl.u32 %v975, 7
        %v977 = vsub.s32 %v579, %v976
        %v978 = vrot.slane %v964, %v977
        %v979 = vsel %vm584, %v978, %v974
        %v980 = vlaneseq
        %v981 = vshrl.u32 %v980, 7
        %v982 = vsub.s32 %v586, %v981
        %v983 = vrot.slane %v967, %v982
        %v984 = vsel %vm591, %v983, %v979
        %v985 = vlaneseq
        %v986 = vshrl.u32 %v985, 7
        %v987 = vsub.s32 %v593, %v986
        %v988 = vrot.slane %v970, %v987
        %v989 = vsel %vm598, %v988, %v984
        %v991 = vunpack.c.l.s4 1966171168
        %v992 = vunpack.c.0.s8 %v991
        %v993 = vlaneseq
        %v994 = vshrl.u32 %v993, 7
        %v995 = vsub.s32 %v992, %v994
        %v996 = vrot.slane %v989, %v995
        %v998 = vunpack.c.l.s4 1966171168
        %v999 = vunpack.c.0.s8 %v998
        %v1000 = vlaneseq
        %v1001 = vshrl.u32 %v1000, 7
        %v1002 = vsub.s32 %v999, %v1001
        %v1003 = vrot.slane %v996, %v1002
        %v1005 = vmax.f32 %v618, %v1003
        %1006 = vst.msk [vmem:[%s202] sm:$0x1] %vm616, %v1005
        %s1007 = sand.u32 %s82, 1
        %s1008 = scalar_lea.sflag [#allocation4], %s1007
        %s1009 = sand.u32 %s82, 1
        %s1010 = scalar_lea.vmem [#allocation5], %s1009
        %s1011 = sand.u32 %s110, 1
        %s1012 = scalar_lea.sflag [#allocation7], %s1011
        %s1013 = sand.u32 %s110, 1
        %s1014 = scalar_lea.vmem [#allocation6], %s1013
        // Predicated region
        $region33: #{tpu_custom_call.1} parent=23 // pred_check
          %p1015 = pneg %p92
        $region34: #{tpu_custom_call.1} parent=23 // pred_check_branch
          %1017 = sbr.rel (%p1015) target = $region36
        $region35: #{tpu_custom_call.1} parent=23 // pred_region
          %s1019 = ssub.s32 16, 16
          %1020 = vsyncadd %s1008, %s1019
          %s1021 = sadd.s32 %s29, %s28
          %s1022 = smul.addr %s1021, 16
          %s1023 = scalar_lea.hbm %s1, %s1022
          %s1025 = sshll.u32 %s1010, 4
          %s1026 = int_to_ptr.vmem [resolvable:$true] %s1025
          %1028 = dma.vmem_to_hbm [thread:$0]  %s1026, 16, %s1023, %s1008
        $region36: #{tpu_custom_call.1} parent=23 // pred_fallthru
          _
        // Predicated region
        $region37: #{tpu_custom_call.1} parent=23 // pred_check
          %p1029 = pneg %p120
        $region38: #{tpu_custom_call.1} parent=23 // pred_check_branch
          %1031 = sbr.rel (%p1029) target = $region40
        $region39: #{tpu_custom_call.1} parent=23 // pred_region
          %s1033 = ssub.s32 16, 16
          %1034 = vsyncadd %s1012, %s1033
          %s1035 = sadd.s32 %s29, %s28
          %s1036 = smul.addr %s1035, 16
          %s1037 = scalar_lea.hbm %s2, %s1036
          %s1039 = sshll.u32 %s1014, 4
          %s1040 = int_to_ptr.vmem [resolvable:$true] %s1039
          %1042 = dma.vmem_to_hbm [thread:$0]  %s1040, 16, %s1037, %s1012
        $region40: #{tpu_custom_call.1} parent=23 // pred_fallthru
          _
      $region24: #{tpu_custom_call.1} parent=5 // pred_fallthru
        _
      %p1043 = scmp.le.s32.totalorder 2, %s18
      // Predicated region
      $region41: #{tpu_custom_call.1} parent=5 // pred_check
        %p1044 = pneg %p1043
      $region42: #{tpu_custom_call.1} parent=5 // pred_check_branch
        %1046 = sbr.rel (%p1044) target = $region44
      $region43: #{tpu_custom_call.1} parent=5 // pred_region
        %s1047 = ssub.s32 %s18, 2
        // Predicated region
        $region45: #{tpu_custom_call.1} parent=43 // pred_check
          %p1048 = pneg %p98
        $region46: #{tpu_custom_call.1} parent=43 // pred_check_branch
          %1050 = sbr.rel (%p1048) target = $region48
        $region47: #{tpu_custom_call.1} parent=43 // pred_region
          %s1051 = sand.u32 %s83, 1
          %s1052 = scalar_lea.sflag [#allocation4], %s1051
          %s1053 = sand.u32 %s83, 1
          %s1054 = scalar_lea.vmem [#allocation5], %s1053
          %1055 = dma.done %s1052, 16
        $region48: #{tpu_custom_call.1} parent=43 // pred_fallthru
          _
        // Predicated region
        $region49: #{tpu_custom_call.1} parent=43 // pred_check
          %p1056 = pneg %p126
        $region50: #{tpu_custom_call.1} parent=43 // pred_check_branch
          %1058 = sbr.rel (%p1056) target = $region52
        $region51: #{tpu_custom_call.1} parent=43 // pred_region
          %s1059 = sand.u32 %s111, 1
          %s1060 = scalar_lea.sflag [#allocation7], %s1059
          %s1061 = sand.u32 %s111, 1
          %s1062 = scalar_lea.vmem [#allocation6], %s1061
          %1063 = dma.done %s1060, 16
        $region52: #{tpu_custom_call.1} parent=43 // pred_fallthru
          _
      $region44: #{tpu_custom_call.1} parent=5 // pred_fallthru
        _
    $region6: #{tpu_custom_call.1} parent=1 // loop_footer
      %s22 = sadd.s32 1, %s18
    $region7: #{tpu_custom_call.1} parent=1 // loop_footer_branch
      %17 = sbr.rel target = $region3
    $region8: #{tpu_custom_call.1} parent=1 // loop_exit
      _
    %1064 = vsyncpa [#allocation3], 1
    %s1065 = scalar_lea.sflag [#allocation3], 1
    %1066 = vsyncpa %s1065, 1
    %1067 = vsyncpa [#allocation4], 1
    %s1068 = scalar_lea.sflag [#allocation4], 1
    %1069 = vsyncpa %s1068, 1
    %1070 = vsyncpa [#allocation7], 1
    %s1071 = scalar_lea.sflag [#allocation7], 1
    %1072 = vsyncpa %s1071, 1

</llo_original>
